<compile_context>
chip_gen: v7x
topology: tpu7x:2x2x1
jax: 0.10.0
libtpu: 0.0.40
codegen_flags: <defaults>
</compile_context>

<pallas_src>
import functools

import jax
import jax.numpy as jnp
from jax.experimental import pallas as pl
from jax.experimental.pallas import tpu as pltpu


def _mul_sub_kernel(org_ref, minus_ref, out_ref, *, gamma):
    # gamma is a Python float baked in at trace time (weakly typed scalar, so
    # no precision loss for bf16/fp8 inputs and nothing to load per step).
    out_ref[...] = (gamma * (org_ref[...] - minus_ref[...])).astype(out_ref.dtype)


def _choose_lane_width(n):
    """Pick a lane-dense width (multiple of 128); prefer one that divides n."""
    for lane in (4096, 2048, 1024, 512, 256, 128):
        if n % lane == 0:
            return lane, False
    return 1024, True  # fall back to padding


def _choose_tile_rows(rows, lane, itemsize):
    """Pick block row count T: ~2 MiB tiles, multiple of 8, enough grid steps."""
    if rows <= 8:
        return rows  # full extent satisfies the (8,128) tile rule
    target_tile_bytes = 2 * 1024 * 1024
    t = max(8, (target_tile_bytes // (lane * itemsize)) // 8 * 8)
    # Keep >= ~16 grid steps when possible (pipeline depth + v7x megacore).
    min_steps = 16
    t_cap = -(-rows // min_steps)           # ceil(rows / min_steps)
    t_cap = max(8, ((t_cap + 7) // 8) * 8)  # round up to sublane multiple
    t = min(t, t_cap)
    t = min(t, (rows // 8) * 8)             # never exceed the array extent
    return max(t, 8)


def multiple_original_layer(x: dict, gamma: float) -> dict:
    """JAX/Pallas equivalent of MultipleOriginalLayer.forward.

    x is a dict containing 'conv1_input' and 'minus_output' (same shape &
    dtype, any layout). Returns the dict with 'multi_output' added.
    """
    org = x["conv1_input"]
    minus = x["minus_output"]
    assert org.shape == minus.shape, "conv1_input / minus_output shape mismatch"
    assert org.dtype == minus.dtype, "conv1_input / minus_output dtype mismatch"

    orig_shape = org.shape
    n = org.size
    itemsize = jnp.dtype(org.dtype).itemsize

    lane, needs_pad = _choose_lane_width(n)

    org_flat = org.reshape(-1)
    minus_flat = minus.reshape(-1)
    n_padded = ((n + lane - 1) // lane) * lane
    if needs_pad and n_padded != n:
        pad = n_padded - n
        org_flat = jnp.pad(org_flat, (0, pad))
        minus_flat = jnp.pad(minus_flat, (0, pad))

    rows = n_padded // lane
    org2 = org_flat.reshape(rows, lane)
    minus2 = minus_flat.reshape(rows, lane)

    tile_rows = _choose_tile_rows(rows, lane, itemsize)
    grid = (pl.cdiv(rows, tile_rows),)

    block = pl.BlockSpec((tile_rows, lane), lambda i: (i, 0))

    out2 = pl.pallas_call(
        functools.partial(_mul_sub_kernel, gamma=float(gamma)),
        out_shape=jax.ShapeDtypeStruct((rows, lane), org.dtype),
        grid=grid,
        in_specs=[block, block],
        out_specs=block,
        compiler_params=pltpu.CompilerParams(
            dimension_semantics=("parallel",),
            vmem_limit_bytes=32 * 1024 * 1024,  # explicit; safe on v5e/v6e/v7x
        ),
    )(org2, minus2)

    out_flat = out2.reshape(-1)
    if n_padded != n:
        out_flat = out_flat[:n]
    out = out_flat.reshape(orig_shape)

    out_dict = dict(x)
    out_dict["multi_output"] = out
    return out_dict


if __name__ == "__main__":
    key = jax.random.PRNGKey(0)
    k1, k2 = jax.random.split(key)

    B, C, H, W = 2, 4, 16, 16
    gamma = 0.5

    conv1_input = jax.random.normal(k1, (B, C, H, W), dtype=jnp.float32)
    minus_output = jax.random.normal(k2, (B, C, H, W), dtype=jnp.float32)

    x = {"conv1_input": conv1_input, "minus_output": minus_output}

    result = multiple_original_layer(x, gamma)
    multi_output = jax.block_until_ready(result["multi_output"])

    # Reference check against plain JAX semantics of the PyTorch forward.
    ref = gamma * (conv1_input - minus_output)
    assert multi_output.shape == (B, C, H, W)
    assert multi_output.dtype == conv1_input.dtype
    assert jnp.allclose(multi_output, ref, atol=1e-6), "mismatch vs reference"

    print("KERNEL_OK")
</pallas_src>

<mosaic_0001>
module attributes {stable_mosaic.version = 11 : i64} {
  func.func @_mul_sub_kernel(%arg0: i32, %arg1: memref<1x2048xf32, #tpu.memory_space<vmem>>, %arg2: memref<1x2048xf32, #tpu.memory_space<vmem>>, %arg3: memref<1x2048xf32, #tpu.memory_space<vmem>>) attributes {dimension_semantics = [#tpu.dimension_semantics<parallel>], iteration_bounds = array<i64: 1>, scalar_prefetch = 0 : i64, scratch_operands = 0 : i64, tpu.core_type = #tpu.core_type<tc>, window_params = [{transform_indices = @transform_0, window_bounds = array<i64: 1, 2048>}, {transform_indices = @transform_1, window_bounds = array<i64: 1, 2048>}, {transform_indices = @transform_2, window_bounds = array<i64: 1, 2048>}]} {
    %c0 = arith.constant 0 : index
    %c0_0 = arith.constant 0 : index
    %0 = vector.load %arg1[%c0, %c0_0] : memref<1x2048xf32, #tpu.memory_space<vmem>>, vector<1x2048xf32>
    %c0_1 = arith.constant 0 : index
    %c0_2 = arith.constant 0 : index
    %1 = vector.load %arg2[%c0_1, %c0_2] : memref<1x2048xf32, #tpu.memory_space<vmem>>, vector<1x2048xf32>
    %2 = arith.subf %0, %1 : vector<1x2048xf32>
    %cst = arith.constant 5.000000e-01 : f32
    %3 = vector.broadcast %cst : f32 to vector<1x2048xf32>
    %4 = arith.mulf %3, %2 : vector<1x2048xf32>
    %c0_3 = arith.constant 0 : index
    %c0_4 = arith.constant 0 : index
    %5 = vector.load %arg3[%c0_3, %c0_4] : memref<1x2048xf32, #tpu.memory_space<vmem>>, vector<1x2048xf32>
    tpu.vector_store %arg3[%c0_3, %c0_4], %4 {strides = array<i32>} : memref<1x2048xf32, #tpu.memory_space<vmem>>, vector<1x2048xf32>,
    return
  }
  func.func @transform_0(%arg0: i32) -> (i32, i32) {
    %c0_i32 = arith.constant 0 : i32
    %c0_i32_0 = arith.constant 0 : i32
    return %arg0, %c0_i32 : i32, i32
  }
  func.func @transform_1(%arg0: i32) -> (i32, i32) {
    %c0_i32 = arith.constant 0 : i32
    %c0_i32_0 = arith.constant 0 : i32
    return %arg0, %c0_i32 : i32, i32
  }
  func.func @transform_2(%arg0: i32) -> (i32, i32) {
    %c0_i32 = arith.constant 0 : i32
    %c0_i32_0 = arith.constant 0 : i32
    return %arg0, %c0_i32 : i32, i32
  }
}

</mosaic_0001>

<llo_original>
// kernel: tpu_custom_call.1
$region0: #{tpu_custom_call.1}
  #allocation0 [shape = 'u32[]', space=smem, size = 0x4, offset = 0x4, fixed_abs, tag = 'smem constant byte address 0x4 - core index']
  #allocation1 [shape = 'u32[144,128]{1,0:T(1,128)}', space=vmem, size = 0x12000, scoped, tag = 'internal scratch']
  %s0 = inlined_call_operand.hbm [shape: f32[1,2048], index: 0, kind: input, shape index: {}]
  %s1 = inlined_call_operand.hbm [shape: f32[1,2048], index: 1, kind: input, shape index: {}]
  %s2 = inlined_call_operand.hbm [shape: f32[1,2048], index: 2, kind: output, shape index: {}]
  %s3 = sld [smem:[#allocation0]]
  $region26: #{tpu_custom_call.1} parent=0
    _
  %s5 = ssub.s32 1, %s3
  %s6 = scalar_select 0, %s5, %s3
  $region1: #{tpu_custom_call.1} parent=0
    #allocation2 [shape = 'u8[8192]{0}', space=vmem, size = 0x2000, scoped, tag = 'input window, operand 0, single buffered']
    #allocation3 [shape = 's32[1]{0}', space=sflag, size = 0x4, scoped, tag = 'scoped memory for tpu_custom_call.1']
    #allocation4 [shape = 's32[1]{0}', space=sflag, size = 0x4, scoped, tag = 'scoped memory for tpu_custom_call.1']
    #allocation5 [shape = 'u8[8192]{0}', space=vmem, size = 0x2000, scoped, tag = 'input window, operand 1, single buffered']
    #allocation6 [shape = 's32[1]{0}', space=sflag, size = 0x4, scoped, tag = 'scoped memory for tpu_custom_call.1']
    #allocation7 [shape = 'u8[8192]{0}', space=vmem, size = 0x2000, scoped, tag = 'output window, operand 0, single buffered']
    %7 = vsyncpa [#allocation3], 0
    %8 = vsyncpa [#allocation6], 0
    %9 = vsyncpa [#allocation4], 0
    // Predicated region
    $region2: #{tpu_custom_call.1} parent=1 // pred_check
      _
    $region3: #{tpu_custom_call.1} parent=1 // pred_check_branch
      %11 = sbr.rel (0) target = $region5
    $region4: #{tpu_custom_call.1} parent=1 // pred_region
      %s13 = ssub.s32 256, 256
      %14 = vsyncadd [#allocation3], %s13
      %s16 = sshll.u32 [#allocation2], 4
      %s17 = int_to_ptr.vmem [resolvable:$true] %s16
      %19 = dma.hbm_to_vmem [thread:$0]  %s0, 256, %s17, [#allocation3]
    $region5: #{tpu_custom_call.1} parent=1 // pred_fallthru
      _
    // Predicated region
    $region6: #{tpu_custom_call.1} parent=1 // pred_check
      _
    $region7: #{tpu_custom_call.1} parent=1 // pred_check_branch
      %21 = sbr.rel (0) target = $region9
    $region8: #{tpu_custom_call.1} parent=1 // pred_region
      %s23 = ssub.s32 256, 256
      %24 = vsyncadd [#allocation6], %s23
      %s26 = sshll.u32 [#allocation5], 4
      %s27 = int_to_ptr.vmem [resolvable:$true] %s26
      %29 = dma.hbm_to_vmem [thread:$0]  %s1, 256, %s27, [#allocation6]
    $region9: #{tpu_custom_call.1} parent=1 // pred_fallthru
      _
    // Predicated region
    $region10: #{tpu_custom_call.1} parent=1 // pred_check
      _
    $region11: #{tpu_custom_call.1} parent=1 // pred_check_branch
      %31 = sbr.rel (0) target = $region13
    $region12: #{tpu_custom_call.1} parent=1 // pred_region
      %32 = dma.done [#allocation3], 256
    $region13: #{tpu_custom_call.1} parent=1 // pred_fallthru
      _
    // Predicated region
    $region14: #{tpu_custom_call.1} parent=1 // pred_check
      _
    $region15: #{tpu_custom_call.1} parent=1 // pred_check_branch
      %34 = sbr.rel (0) target = $region17
    $region16: #{tpu_custom_call.1} parent=1 // pred_region
      %35 = dma.done [#allocation6], 256
    $region17: #{tpu_custom_call.1} parent=1 // pred_fallthru
      _
    %v36 = vld [vmem:[#allocation2] sm:$0xff]
    %v37 = vld [vmem:[#allocation2 + $0x8] sm:$0xff]
    %v38 = vld [vmem:[#allocation5] sm:$0xff]
    %v39 = vld [vmem:[#allocation5 + $0x8] sm:$0xff]
    %v40 = vsub.f32 %v36, %v38
    %v41 = vsub.f32 %v37, %v39
    %v42 = vmul.f32 %v40, 0.5
    %v43 = vmul.f32 %v41, 0.5
    %44 = vst [vmem:[#allocation7] sm:$0xff] %v42
    %45 = vst [vmem:[#allocation7 + $0x8] sm:$0xff] %v43
    // Predicated region
    $region18: #{tpu_custom_call.1} parent=1 // pred_check
      _
    $region19: #{tpu_custom_call.1} parent=1 // pred_check_branch
      %47 = sbr.rel (0) target = $region21
    $region20: #{tpu_custom_call.1} parent=1 // pred_region
      %s49 = ssub.s32 256, 256
      %50 = vsyncadd [#allocation4], %s49
      %s52 = sshll.u32 [#allocation7], 4
      %s53 = int_to_ptr.vmem [resolvable:$true] %s52
      %55 = dma.vmem_to_hbm [thread:$0]  %s53, 256, %s2, [#allocation4]
    $region21: #{tpu_custom_call.1} parent=1 // pred_fallthru
      _
    // Predicated region
    $region22: #{tpu_custom_call.1} parent=1 // pred_check
      _
    $region23: #{tpu_custom_call.1} parent=1 // pred_check_branch
      %57 = sbr.rel (0) target = $region25
    $region24: #{tpu_custom_call.1} parent=1 // pred_region
      %58 = dma.done [#allocation4], 256
    $region25: #{tpu_custom_call.1} parent=1 // pred_fallthru
      _
    %59 = vsyncpa [#allocation3], 1
    %60 = vsyncpa [#allocation6], 1
    %61 = vsyncpa [#allocation4], 1

</llo_original>
